<compile_context>
chip_gen: v6e
topology: v6e:2x2x1
jax: 0.10.0
libtpu: 0.0.40
codegen_flags: <defaults>
</compile_context>

<pallas_src>
import functools

import jax
import jax.numpy as jnp
from jax.experimental import pallas as pl
from jax.experimental.pallas import tpu as pltpu


def _mc_linear_kernel(x_ref, w_ref, b_ref, o_ref, *, tc, f_in, f_out):
    """One (channel-block, batch-block) grid step.

    x_ref: (TB, Tc*F_in)    lane-dense x block covering Tc channels
    w_ref: (Tc, F_in, F_out) pre-transposed weights (MXU-natural orientation)
    b_ref: (1, Tc*F_out)    lane-dense bias row
    o_ref: (TB, Tc*F_out)   lane-dense output block
    """
    # Static unroll over the channels of this block.  Each iteration's f32
    # accumulator is consumed immediately by its store, so only one (TB, F_out)
    # accumulator is live at a time (no concatenate, no Tc-wide live set).
    for c in range(tc):
        xc = x_ref[:, c * f_in:(c + 1) * f_in]                  # (TB, F_in)
        wc = w_ref[c]                                           # (F_in, F_out)
        acc = jnp.dot(xc, wc, preferred_element_type=jnp.float32)  # (TB, F_out)
        bc = b_ref[:, c * f_out:(c + 1) * f_out].astype(jnp.float32)  # (1, F_out)
        o_ref[:, c * f_out:(c + 1) * f_out] = (acc + bc).astype(o_ref.dtype)


def _vmem_budget_and_limit():
    """Chip-aware (block-picker budget, vmem_limit_bytes cap)."""
    cap = 0
    try:
        info = pltpu.get_tpu_info()
        cap = int(getattr(info, "vmem_capacity_bytes", 0) or 0)
    except Exception:
        cap = 0
    if cap > 64 * 1024 * 1024:
        # v5e / v6e: 128 MiB physical VMEM -> big blocks, limit up to 64 MiB.
        return 32 * 1024 * 1024, 64 * 1024 * 1024
    # v7x-class (64 MiB per TensorCore) or unknown chip: leave headroom for
    # Mosaic internal scratch and pipeline bookkeeping.
    return 24 * 1024 * 1024, 48 * 1024 * 1024


def _pick_blocks(B, C, F_in, F_out, x_itemsize, w_itemsize, budget_bytes):
    """Pick (batch_block TB, channel_block Tc).

    Tc must divide C and keep the 2-D x/out blocks lane-dense (Tc*F_in and
    Tc*F_out multiples of 128, or Tc == C i.e. full extent).  TB is the full
    batch when small, otherwise a multiple of 8 (the wrapper pads B up to a
    multiple of TB).  The working set includes double-buffered blocks plus
    the single live f32 accumulator.
    """
    def legal_tc(tc):
        if C % tc != 0:
            return False
        if tc == C:
            return True
        return (tc * F_in) % 128 == 0 and (tc * F_out) % 128 == 0

    tc_cands = [tc for tc in range(1, C + 1) if legal_tc(tc)]
    # Bound the static channel unroll (compile time / code size); lane density
    # is already reached at modest Tc.
    unroll_cap = max(32, min(tc_cands))
    tc_cands = [t for t in tc_cands if t <= unroll_cap]

    def step_bytes(tb, tc):
        x_blk = tb * tc * F_in * x_itemsize
        w_blk = tc * F_in * F_out * w_itemsize
        b_blk = tc * F_out * x_itemsize
        o_blk = tb * tc * F_out * x_itemsize
        acc_f32 = tb * F_out * 4          # one live per-channel f32 accumulator
        return 2 * (x_blk + w_blk + b_blk + o_blk) + acc_f32  # double-buffered

    if B <= 512:
        tb = B                             # full extent: always layout-legal
    else:
        tb = 0
        for cand in range(512, 7, -8):     # largest multiple of 8 dividing B
            if B % cand == 0:
                tb = cand
                break
        if tb == 0:
            tb = 512                       # wrapper pads B up to a multiple

    while True:
        fitting = [tc for tc in tc_cands if step_bytes(tb, tc) <= budget_bytes]
        if fitting:
            tc = max(fitting)
            # Prefer >= 2 total grid steps so v7x's two TensorCores both get
            # work (neutral on single-core v5e / v6e).
            n_b = -(-B // tb)
            if n_b == 1 and tc == C:
                halved = [t for t in fitting if t <= C // 2]
                if halved:
                    tc = max(halved)
            return tb, tc
        if tb <= 8:
            raise ValueError(
                "multi_channels_linear: no (batch_block, channel_block) tiling "
                f"fits the VMEM budget ({budget_bytes} bytes) for "
                f"B={B}, C={C}, F_in={F_in}, F_out={F_out}.")
        tb = max(8, (tb // 2 + 7) // 8 * 8)   # keep a multiple of 8


def multi_channels_linear(x, weight, bias=None, *, batch_block=None,
                          channel_block=None):
    """x: (B, C, F_in), weight: (C, F_out, F_in), bias: (C, F_out) -> (B, C, F_out)."""
    B, C, F_in = x.shape
    Cw, F_out, F_in_w = weight.shape
    assert C == Cw and F_in == F_in_w
    if bias is None:
        bias = jnp.zeros((C, F_out), weight.dtype)
    assert bias.shape == (C, F_out)

    x_isz = jnp.dtype(x.dtype).itemsize
    w_isz = jnp.dtype(weight.dtype).itemsize
    budget, limit_cap = _vmem_budget_and_limit()

    tb_auto, tc_auto = _pick_blocks(B, C, F_in, F_out, x_isz, w_isz, budget)
    tb = batch_block or tb_auto
    tc = channel_block or tc_auto
    assert C % tc == 0, "channel_block must divide channels"

    n_cblocks = C // tc
    B_pad = -(-B // tb) * tb
    n_bblocks = B_pad // tb

    # Free, contiguous reshapes (no HBM transpose of activations): channels
    # folded into lanes so x / bias / out blocks are lane-dense.
    x2 = x.reshape(B, C * F_in)
    if B_pad != B:
        x2 = jnp.pad(x2, ((0, B_pad - B), (0, 0)))
    b2 = bias.reshape(1, C * F_out)
    # One-time transpose of the (small) weight to the MXU-natural orientation.
    w_t = jnp.transpose(weight, (0, 2, 1))        # (C, F_in, F_out)

    step_bytes = (2 * (tb * tc * F_in * x_isz
                       + tc * F_in * F_out * w_isz
                       + tc * F_out * x_isz
                       + tb * tc * F_out * x_isz)
                  + tb * F_out * 4)
    vmem_limit = int(min(max(step_bytes + (4 << 20), 16 << 20), limit_cap))

    kernel = functools.partial(_mc_linear_kernel, tc=tc, f_in=F_in, f_out=F_out)

    out2 = pl.pallas_call(
        kernel,
        out_shape=jax.ShapeDtypeStruct((B_pad, C * F_out), x.dtype),
        grid_spec=pltpu.PrefetchScalarGridSpec(
            num_scalar_prefetch=0,
            # Channel blocks OUTER, batch blocks INNER: weight/bias block
            # indices are constant across the inner axis -> stay resident,
            # no re-DMA per batch step.
            grid=(n_cblocks, n_bblocks),
            in_specs=[
                pl.BlockSpec((tb, tc * F_in), lambda c, b: (b, c)),
                pl.BlockSpec((tc, F_in, F_out), lambda c, b: (c, 0, 0)),
                pl.BlockSpec((1, tc * F_out), lambda c, b: (0, c)),
            ],
            out_specs=pl.BlockSpec((tb, tc * F_out), lambda c, b: (b, c)),
        ),
        compiler_params=pltpu.CompilerParams(
            dimension_semantics=("parallel", "parallel"),
            vmem_limit_bytes=vmem_limit,
        ),
    )(x2, w_t, b2)

    if B_pad != B:
        out2 = out2[:B]
    return out2.reshape(B, C, F_out)


if __name__ == "__main__":
    key = jax.random.PRNGKey(0)

    def run_case(B, C, F_in, F_out, key):
        kx, kw, kb = jax.random.split(key, 3)
        x = jax.random.normal(kx, (B, C, F_in), dtype=jnp.float32)
        w_bound = 1.0 / jnp.sqrt(jnp.float32(F_in))
        weight = jax.random.uniform(kw, (C, F_out, F_in), dtype=jnp.float32,
                                    minval=-w_bound, maxval=w_bound)
        b_bound = 1.0 / jnp.sqrt(jnp.float32(F_in))
        bias = jax.random.uniform(kb, (C, F_out), dtype=jnp.float32,
                                  minval=-b_bound, maxval=b_bound)
        out = multi_channels_linear(x, weight, bias)
        out = jax.block_until_ready(out)
        # Reference: out[b,c,o] = sum_i W[c,o,i] * x[b,c,i] + bias[c,o]
        ref = jnp.einsum("coi,bci->bco", weight, x) + bias[None, :, :]
        assert out.shape == (B, C, F_out)
        assert jnp.allclose(out, ref, atol=1e-4, rtol=1e-4)

    k1, k2 = jax.random.split(key)
    # Small shapes consistent with the module (many small per-channel linears).
    run_case(B=8, C=4, F_in=32, F_out=32, key=k1)
    # Exercises multiple channel blocks + per-channel stores at lane offsets.
    run_case(B=40, C=8, F_in=64, F_out=32, key=k2)

    print("KERNEL_OK")
</pallas_src>

<mosaic_0001>
module attributes {stable_mosaic.version = 11 : i64} {
  func.func @_mc_linear_kernel(%arg0: i32, %arg1: i32, %arg2: memref<8x128xf32, #tpu.memory_space<vmem>>, %arg3: memref<4x32x32xf32, #tpu.memory_space<vmem>>, %arg4: memref<1x128xf32, #tpu.memory_space<vmem>>, %arg5: memref<8x128xf32, #tpu.memory_space<vmem>>) attributes {dimension_semantics = [#tpu.dimension_semantics<parallel>, #tpu.dimension_semantics<parallel>], iteration_bounds = array<i64: 1, 1>, scalar_prefetch = 0 : i64, scratch_operands = 0 : i64, tpu.core_type = #tpu.core_type<tc>, window_params = [{transform_indices = @transform_0, window_bounds = array<i64: 8, 128>}, {transform_indices = @transform_1, window_bounds = array<i64: 4, 32, 32>}, {transform_indices = @transform_2, window_bounds = array<i64: 1, 128>}, {transform_indices = @transform_3, window_bounds = array<i64: 8, 128>}]} {
    %c0 = arith.constant 0 : index
    %c0_0 = arith.constant 0 : index
    %0 = vector.load %arg2[%c0, %c0_0] : memref<8x128xf32, #tpu.memory_space<vmem>>, vector<8x32xf32>
    %c0_1 = arith.constant 0 : index
    %c0_2 = arith.constant 0 : index
    %c0_3 = arith.constant 0 : index
    %1 = vector.load %arg3[%c0_1, %c0_2, %c0_3] : memref<4x32x32xf32, #tpu.memory_space<vmem>>, vector<1x32x32xf32>
    %2 = vector.shape_cast %1 : vector<1x32x32xf32> to vector<32x32xf32>
    %cst = arith.constant dense<0.000000e+00> : vector<8x32xf32>
    %3 = tpu.matmul %0, %2, %cst {dimension_numbers = #tpu.dot_dimension_numbers<[1], [0], [0], [1], [0, 0, 1, 1], [], []>} : vector<8x32xf32>, vector<32x32xf32>, vector<8x32xf32> -> vector<8x32xf32>
    %c0_4 = arith.constant 0 : index
    %c0_5 = arith.constant 0 : index
    %4 = vector.load %arg4[%c0_4, %c0_5] : memref<1x128xf32, #tpu.memory_space<vmem>>, vector<1x32xf32>
    %5 = vector.broadcast %4 : vector<1x32xf32> to vector<8x32xf32>
    %6 = arith.addf %3, %5 : vector<8x32xf32>
    %c0_6 = arith.constant 0 : index
    %c0_7 = arith.constant 0 : index
    %7 = vector.load %arg5[%c0_6, %c0_7] : memref<8x128xf32, #tpu.memory_space<vmem>>, vector<8x32xf32>
    tpu.vector_store %arg5[%c0_6, %c0_7], %6 {strides = array<i32>} : memref<8x128xf32, #tpu.memory_space<vmem>>, vector<8x32xf32>,
    %c0_8 = arith.constant 0 : index
    %c32 = arith.constant 32 : index
    %8 = vector.load %arg2[%c0_8, %c32] : memref<8x128xf32, #tpu.memory_space<vmem>>, vector<8x32xf32>
    %c1 = arith.constant 1 : index
    %c0_9 = arith.constant 0 : index
    %c0_10 = arith.constant 0 : index
    %9 = vector.load %arg3[%c1, %c0_9, %c0_10] : memref<4x32x32xf32, #tpu.memory_space<vmem>>, vector<1x32x32xf32>
    %10 = vector.shape_cast %9 : vector<1x32x32xf32> to vector<32x32xf32>
    %cst_11 = arith.constant dense<0.000000e+00> : vector<8x32xf32>
    %11 = tpu.matmul %8, %10, %cst_11 {dimension_numbers = #tpu.dot_dimension_numbers<[1], [0], [0], [1], [0, 0, 1, 1], [], []>} : vector<8x32xf32>, vector<32x32xf32>, vector<8x32xf32> -> vector<8x32xf32>
    %c0_12 = arith.constant 0 : index
    %c32_13 = arith.constant 32 : index
    %12 = vector.load %arg4[%c0_12, %c32_13] : memref<1x128xf32, #tpu.memory_space<vmem>>, vector<1x32xf32>
    %13 = vector.broadcast %12 : vector<1x32xf32> to vector<8x32xf32>
    %14 = arith.addf %11, %13 : vector<8x32xf32>
    %c0_14 = arith.constant 0 : index
    %c32_15 = arith.constant 32 : index
    %15 = vector.load %arg5[%c0_14, %c32_15] : memref<8x128xf32, #tpu.memory_space<vmem>>, vector<8x32xf32>
    tpu.vector_store %arg5[%c0_14, %c32_15], %14 {strides = array<i32>} : memref<8x128xf32, #tpu.memory_space<vmem>>, vector<8x32xf32>,
    %c0_16 = arith.constant 0 : index
    %c64 = arith.constant 64 : index
    %16 = vector.load %arg2[%c0_16, %c64] : memref<8x128xf32, #tpu.memory_space<vmem>>, vector<8x32xf32>
    %c2 = arith.constant 2 : index
    %c0_17 = arith.constant 0 : index
    %c0_18 = arith.constant 0 : index
    %17 = vector.load %arg3[%c2, %c0_17, %c0_18] : memref<4x32x32xf32, #tpu.memory_space<vmem>>, vector<1x32x32xf32>
    %18 = vector.shape_cast %17 : vector<1x32x32xf32> to vector<32x32xf32>
    %cst_19 = arith.constant dense<0.000000e+00> : vector<8x32xf32>
    %19 = tpu.matmul %16, %18, %cst_19 {dimension_numbers = #tpu.dot_dimension_numbers<[1], [0], [0], [1], [0, 0, 1, 1], [], []>} : vector<8x32xf32>, vector<32x32xf32>, vector<8x32xf32> -> vector<8x32xf32>
    %c0_20 = arith.constant 0 : index
    %c64_21 = arith.constant 64 : index
    %20 = vector.load %arg4[%c0_20, %c64_21] : memref<1x128xf32, #tpu.memory_space<vmem>>, vector<1x32xf32>
    %21 = vector.broadcast %20 : vector<1x32xf32> to vector<8x32xf32>
    %22 = arith.addf %19, %21 : vector<8x32xf32>
    %c0_22 = arith.constant 0 : index
    %c64_23 = arith.constant 64 : index
    %23 = vector.load %arg5[%c0_22, %c64_23] : memref<8x128xf32, #tpu.memory_space<vmem>>, vector<8x32xf32>
    tpu.vector_store %arg5[%c0_22, %c64_23], %22 {strides = array<i32>} : memref<8x128xf32, #tpu.memory_space<vmem>>, vector<8x32xf32>,
    %c0_24 = arith.constant 0 : index
    %c96 = arith.constant 96 : index
    %24 = vector.load %arg2[%c0_24, %c96] : memref<8x128xf32, #tpu.memory_space<vmem>>, vector<8x32xf32>
    %c3 = arith.constant 3 : index
    %c0_25 = arith.constant 0 : index
    %c0_26 = arith.constant 0 : index
    %25 = vector.load %arg3[%c3, %c0_25, %c0_26] : memref<4x32x32xf32, #tpu.memory_space<vmem>>, vector<1x32x32xf32>
    %26 = vector.shape_cast %25 : vector<1x32x32xf32> to vector<32x32xf32>
    %cst_27 = arith.constant dense<0.000000e+00> : vector<8x32xf32>
    %27 = tpu.matmul %24, %26, %cst_27 {dimension_numbers = #tpu.dot_dimension_numbers<[1], [0], [0], [1], [0, 0, 1, 1], [], []>} : vector<8x32xf32>, vector<32x32xf32>, vector<8x32xf32> -> vector<8x32xf32>
    %c0_28 = arith.constant 0 : index
    %c96_29 = arith.constant 96 : index
    %28 = vector.load %arg4[%c0_28, %c96_29] : memref<1x128xf32, #tpu.memory_space<vmem>>, vector<1x32xf32>
    %29 = vector.broadcast %28 : vector<1x32xf32> to vector<8x32xf32>
    %30 = arith.addf %27, %29 : vector<8x32xf32>
    %c0_30 = arith.constant 0 : index
    %c96_31 = arith.constant 96 : index
    %31 = vector.load %arg5[%c0_30, %c96_31] : memref<8x128xf32, #tpu.memory_space<vmem>>, vector<8x32xf32>
    tpu.vector_store %arg5[%c0_30, %c96_31], %30 {strides = array<i32>} : memref<8x128xf32, #tpu.memory_space<vmem>>, vector<8x32xf32>,
    return
  }
  func.func @transform_0(%arg0: i32, %arg1: i32) -> (i32, i32) {
    %c0_i32 = arith.constant 0 : i32
    return %arg1, %arg0 : i32, i32
  }
  func.func @transform_1(%arg0: i32, %arg1: i32) -> (i32, i32, i32) {
    %c0_i32 = arith.constant 0 : i32
    %c0_i32_0 = arith.constant 0 : i32
    %c0_i32_1 = arith.constant 0 : i32
    return %arg0, %c0_i32, %c0_i32_0 : i32, i32, i32
  }
  func.func @transform_2(%arg0: i32, %arg1: i32) -> (i32, i32) {
    %c0_i32 = arith.constant 0 : i32
    %c0_i32_0 = arith.constant 0 : i32
    return %c0_i32, %arg0 : i32, i32
  }
  func.func @transform_3(%arg0: i32, %arg1: i32) -> (i32, i32) {
    %c0_i32 = arith.constant 0 : i32
    return %arg1, %arg0 : i32, i32
  }
}

</mosaic_0001>

<llo_original>
// kernel: tpu_custom_call.1
$region0: #{tpu_custom_call.1}
  #allocation0 [shape = 'u32[]', space=smem, size = 0x4, offset = 0x4, fixed_abs, tag = 'smem constant byte address 0x4 - core index']
  #allocation1 [shape = 'u32[144,128]{1,0:T(1,128)}', space=vmem, size = 0x12000, scoped, tag = 'internal scratch']
  %s0 = inlined_call_operand.hbm [shape: f32[8,128], index: 0, kind: input, shape index: {}]
  %s1 = inlined_call_operand.hbm [shape: f32[4,32,32], index: 1, kind: input, shape index: {}]
  %s2 = inlined_call_operand.vmem [shape: f32[1,128], index: 2, kind: input, shape index: {}]
  %s3 = inlined_call_operand.hbm [shape: f32[8,128], index: 3, kind: output, shape index: {}]
  %s4 = sld [smem:[#allocation0]]
  $region30: #{tpu_custom_call.1} parent=0
    _
  %s6 = ssub.s32 1, %s4
  %s7 = scalar_select 0, %s6, %s4
  $region1: #{tpu_custom_call.1} parent=0
    #allocation2 [shape = 'u8[4096]{0}', space=vmem, size = 0x1000, scoped, tag = 'input window, operand 0, single buffered']
    #allocation3 [shape = 's32[1]{0}', space=sflag, size = 0x4, scoped, tag = 'scoped memory for tpu_custom_call.1']
    #allocation4 [shape = 's32[1]{0}', space=sflag, size = 0x4, scoped, tag = 'scoped memory for tpu_custom_call.1']
    #allocation5 [shape = 'u8[65536]{0}', space=vmem, size = 0x10000, scoped, tag = 'input window, operand 1, single buffered']
    #allocation6 [shape = 's32[1]{0}', space=sflag, size = 0x4, scoped, tag = 'scoped memory for tpu_custom_call.1']
    #allocation7 [shape = 'u8[4096]{0}', space=vmem, size = 0x1000, scoped, tag = 'output window, operand 0, single buffered']
    %8 = vsyncpa [#allocation3], 0
    %9 = vsyncpa [#allocation6], 0
    %10 = vsyncpa [#allocation4], 0
    // Predicated region
    $region2: #{tpu_custom_call.1} parent=1 // pred_check
      _
    $region3: #{tpu_custom_call.1} parent=1 // pred_check_branch
      %12 = sbr.rel (0) target = $region5
    $region4: #{tpu_custom_call.1} parent=1 // pred_region
      %s14 = ssub.s32 128, 128
      %15 = vsyncadd [#allocation3], %s14
      %s17 = sshll.u32 [#allocation2], 4
      %s18 = int_to_ptr.vmem [resolvable:$true] %s17
      %20 = dma.hbm_to_vmem [thread:$0]  %s0, 128, %s18, [#allocation3]
    $region5: #{tpu_custom_call.1} parent=1 // pred_fallthru
      _
    // Predicated region
    $region6: #{tpu_custom_call.1} parent=1 // pred_check
      _
    $region7: #{tpu_custom_call.1} parent=1 // pred_check_branch
      %22 = sbr.rel (0) target = $region9
    $region8: #{tpu_custom_call.1} parent=1 // pred_region
      %s24 = ssub.s32 2048, 2048
      %25 = vsyncadd [#allocation6], %s24
      %s26 = sshll.u32 [#allocation5], 4
      %s27 = int_to_ptr.vmem [resolvable:$true] %s26
      %32 = dma.hbm_to_vmem [thread:$0]  %s1, 2048, %s27, [#allocation6], 128, 128, 8
    $region9: #{tpu_custom_call.1} parent=1 // pred_fallthru
      _
    // Predicated region
    $region10: #{tpu_custom_call.1} parent=1 // pred_check
      _
    $region11: #{tpu_custom_call.1} parent=1 // pred_check_branch
      %34 = sbr.rel (0) target = $region13
    $region12: #{tpu_custom_call.1} parent=1 // pred_region
      _
    $region13: #{tpu_custom_call.1} parent=1 // pred_fallthru
      _
    // Predicated region
    $region14: #{tpu_custom_call.1} parent=1 // pred_check
      _
    $region15: #{tpu_custom_call.1} parent=1 // pred_check_branch
      %36 = sbr.rel (0) target = $region17
    $region16: #{tpu_custom_call.1} parent=1 // pred_region
      %37 = dma.done [#allocation3], 128
    $region17: #{tpu_custom_call.1} parent=1 // pred_fallthru
      _
    // Predicated region
    $region18: #{tpu_custom_call.1} parent=1 // pred_check
      _
    $region19: #{tpu_custom_call.1} parent=1 // pred_check_branch
      %39 = sbr.rel (0) target = $region21
    $region20: #{tpu_custom_call.1} parent=1 // pred_region
      %40 = dma.done [#allocation6], 2048
    $region21: #{tpu_custom_call.1} parent=1 // pred_fallthru
      _
    %v41 = vld [vmem:[#allocation2] sm:$0xff]
    %v42 = vld [vmem:[#allocation5] sm:$0xff]
    %v43 = vld [vmem:[#allocation5 + $0x8] sm:$0xff]
    %v44 = vld [vmem:[#allocation5 + $0x10] sm:$0xff]
    %v45 = vld [vmem:[#allocation5 + $0x18] sm:$0xff]
    %v46 = vld [vmem:[%s2] sm:$0x1]
    %v48 = vlaneseq
    %v49 = vshrl.u32 %v48, 7
    %v50 = vsub.s32 0, %v49
    %v51 = vrot.slane %v46, %v50
    %vm53 = vcmask 261120
    %v55 = vsel %vm53, %v41, 0
    %57 = vmatprep.subr.mxu0 0.0
    %58 = vmatpush1.msra.mxu0 0.0
    %59 = vmatprep.subr.mxu0 0.0
    %60 = vmatpush1.msra.mxu0 0.0
    %61 = vmatprep.subr.mxu0 0.0
    %62 = vmatpush1.msra.mxu0 0.0
    %63 = vmatprep.subr.mxu0 0.0
    %64 = vmatpush1.msra.mxu0 0.0
    %65 = vmatprep.subr.mxu0 0.0
    %66 = vmatpush1.msra.mxu0 0.0
    %67 = vmatprep.subr.mxu0 0.0
    %68 = vmatpush1.msra.mxu0 0.0
    %69 = vmatprep.subr.mxu0 0.0
    %70 = vmatpush1.msra.mxu0 0.0
    %71 = vmatprep.subr.mxu0 0.0
    %72 = vmatpush1.msra.mxu0 0.0
    %73 = vmatprep.subr.mxu0 0.0
    %74 = vmatpush1.msra.mxu0 0.0
    %75 = vmatprep.subr.mxu0 0.0
    %76 = vmatpush1.msra.mxu0 0.0
    %77 = vmatprep.subr.mxu0 0.0
    %78 = vmatpush1.msra.mxu0 0.0
    %79 = vmatprep.subr.mxu0 0.0
    %80 = vmatpush1.msra.mxu0 0.0
    %81 = vmatprep.subr.mxu0 0.0
    %82 = vmatpush1.msra.mxu0 %v45
    %83 = vmatprep.subr.mxu0 0.0
    %84 = vmatpush1.msra.mxu0 %v44
    %85 = vmatprep.subr.mxu0 0.0
    %86 = vmatpush1.msra.mxu0 %v43
    %87 = vmatprep.subr.mxu0 0.0
    %88 = vmatpush1.msra.mxu0 %v42
    %89 = vmatprep.subr.mxu0 0.0
    %90 = vmatpush2.msra.mxu0 0.0
    %91 = vmatprep.subr.mxu0 0.0
    %92 = vmatpush2.msra.mxu0 0.0
    %93 = vmatprep.subr.mxu0 0.0
    %94 = vmatpush2.msra.mxu0 0.0
    %95 = vmatprep.subr.mxu0 0.0
    %96 = vmatpush2.msra.mxu0 0.0
    %97 = vmatprep.subr.mxu0 0.0
    %98 = vmatpush2.msra.mxu0 0.0
    %99 = vmatprep.subr.mxu0 0.0
    %100 = vmatpush2.msra.mxu0 0.0
    %101 = vmatprep.subr.mxu0 0.0
    %102 = vmatpush2.msra.mxu0 0.0
    %103 = vmatprep.subr.mxu0 0.0
    %104 = vmatpush2.msra.mxu0 0.0
    %105 = vmatprep.subr.mxu0 0.0
    %106 = vmatpush2.msra.mxu0 0.0
    %107 = vmatprep.subr.mxu0 0.0
    %108 = vmatpush2.msra.mxu0 0.0
    %109 = vmatprep.subr.mxu0 0.0
    %110 = vmatpush2.msra.mxu0 0.0
    %111 = vmatprep.subr.mxu0 0.0
    %112 = vmatpush2.msra.mxu0 0.0
    %113 = vmatprep.subr.mxu0 0.0
    %114 = vmatpush2.msra.mxu0 0.0
    %115 = vmatprep.subr.mxu0 0.0
    %116 = vmatpush2.msra.mxu0 0.0
    %117 = vmatprep.subr.mxu0 0.0
    %118 = vmatpush2.msra.mxu0 0.0
    %119 = vmatprep.subr.mxu0 0.0
    %120 = vmatpush2.msra.mxu0 0.0
    %121 = vmatprep.mubr.f32.mxu0 0.0
    %122 = vmatmul.mubr.f32.gmra.mxu0 %v55
    %v123 = vpop.f32.mrf.mxu0
    %v124 = vadd.f32 %v51, %v123
    %v125 = vpop.f32.mrf.mxu0
    %126 = vdwg.mxu0
    %127 = vst.msk [vmem:[#allocation7] sm:$0xff] %vm53, %v124
    %v128 = vld [vmem:[#allocation2] sm:$0xff]
    %s129 = scalar_lea.vmem [#allocation5], 32
    %v130 = vld [vmem:[%s129] sm:$0xff]
    %v131 = vld [vmem:[%s129 + $0x8] sm:$0xff]
    %v132 = vld [vmem:[%s129 + $0x10] sm:$0xff]
    %v133 = vld [vmem:[%s129 + $0x18] sm:$0xff]
    %v134 = vld [vmem:[%s2] sm:$0x1]
    %v136 = vlaneseq
    %v137 = vshrl.u32 %v136, 7
    %v138 = vsub.s32 0, %v137
    %v139 = vrot.slane %v134, %v138
    %141 = vrot.lane.b32.xlu0 %v128, 96
    %v142 = vpop.permute.xlu0 %141
    %143 = vrot.lane.b32.xlu0 %v139, 96
    %v144 = vpop.permute.xlu0 %143
    %v146 = vsel %vm53, %v142, 0
    %148 = vmatprep.subr.mxu0 0.0
    %149 = vmatpush1.msra.mxu0 0.0
    %150 = vmatprep.subr.mxu0 0.0
    %151 = vmatpush1.msra.mxu0 0.0
    %152 = vmatprep.subr.mxu0 0.0
    %153 = vmatpush1.msra.mxu0 0.0
    %154 = vmatprep.subr.mxu0 0.0
    %155 = vmatpush1.msra.mxu0 0.0
    %156 = vmatprep.subr.mxu0 0.0
    %157 = vmatpush1.msra.mxu0 0.0
    %158 = vmatprep.subr.mxu0 0.0
    %159 = vmatpush1.msra.mxu0 0.0
    %160 = vmatprep.subr.mxu0 0.0
    %161 = vmatpush1.msra.mxu0 0.0
    %162 = vmatprep.subr.mxu0 0.0
    %163 = vmatpush1.msra.mxu0 0.0
    %164 = vmatprep.subr.mxu0 0.0
    %165 = vmatpush1.msra.mxu0 0.0
    %166 = vmatprep.subr.mxu0 0.0
    %167 = vmatpush1.msra.mxu0 0.0
    %168 = vmatprep.subr.mxu0 0.0
    %169 = vmatpush1.msra.mxu0 0.0
    %170 = vmatprep.subr.mxu0 0.0
    %171 = vmatpush1.msra.mxu0 0.0
    %172 = vmatprep.subr.mxu0 0.0
    %173 = vmatpush1.msra.mxu0 %v133
    %174 = vmatprep.subr.mxu0 0.0
    %175 = vmatpush1.msra.mxu0 %v132
    %176 = vmatprep.subr.mxu0 0.0
    %177 = vmatpush1.msra.mxu0 %v131
    %178 = vmatprep.subr.mxu0 0.0
    %179 = vmatpush1.msra.mxu0 %v130
    %180 = vmatprep.subr.mxu0 0.0
    %181 = vmatpush2.msra.mxu0 0.0
    %182 = vmatprep.subr.mxu0 0.0
    %183 = vmatpush2.msra.mxu0 0.0
    %184 = vmatprep.subr.mxu0 0.0
    %185 = vmatpush2.msra.mxu0 0.0
    %186 = vmatprep.subr.mxu0 0.0
    %187 = vmatpush2.msra.mxu0 0.0
    %188 = vmatprep.subr.mxu0 0.0
    %189 = vmatpush2.msra.mxu0 0.0
    %190 = vmatprep.subr.mxu0 0.0
    %191 = vmatpush2.msra.mxu0 0.0
    %192 = vmatprep.subr.mxu0 0.0
    %193 = vmatpush2.msra.mxu0 0.0
    %194 = vmatprep.subr.mxu0 0.0
    %195 = vmatpush2.msra.mxu0 0.0
    %196 = vmatprep.subr.mxu0 0.0
    %197 = vmatpush2.msra.mxu0 0.0
    %198 = vmatprep.subr.mxu0 0.0
    %199 = vmatpush2.msra.mxu0 0.0
    %200 = vmatprep.subr.mxu0 0.0
    %201 = vmatpush2.msra.mxu0 0.0
    %202 = vmatprep.subr.mxu0 0.0
    %203 = vmatpush2.msra.mxu0 0.0
    %204 = vmatprep.subr.mxu0 0.0
    %205 = vmatpush2.msra.mxu0 0.0
    %206 = vmatprep.subr.mxu0 0.0
    %207 = vmatpush2.msra.mxu0 0.0
    %208 = vmatprep.subr.mxu0 0.0
    %209 = vmatpush2.msra.mxu0 0.0
    %210 = vmatprep.subr.mxu0 0.0
    %211 = vmatpush2.msra.mxu0 0.0
    %212 = vmatprep.mubr.f32.mxu0 0.0
    %213 = vmatmul.mubr.f32.gmra.mxu0 %v146
    %v214 = vpop.f32.mrf.mxu0
    %v215 = vadd.f32 %v144, %v214
    %v216 = vpop.f32.mrf.mxu0
    %217 = vdwg.mxu0
    %219 = vrot.lane.b32.xlu0 %v215, 32
    %v220 = vpop.permute.xlu0 %219
    %vm222 = vcmask 523520
    %223 = vst.msk [vmem:[#allocation7] sm:$0xff] %vm222, %v220
    %v224 = vld [vmem:[#allocation2] sm:$0xff]
    %s225 = scalar_lea.vmem [#allocation5], 64
    %v226 = vld [vmem:[%s225] sm:$0xff]
    %v227 = vld [vmem:[%s225 + $0x8] sm:$0xff]
    %v228 = vld [vmem:[%s225 + $0x10] sm:$0xff]
    %v229 = vld [vmem:[%s225 + $0x18] sm:$0xff]
    %v230 = vld [vmem:[%s2] sm:$0x1]
    %v232 = vlaneseq
    %v233 = vshrl.u32 %v232, 7
    %v234 = vsub.s32 0, %v233
    %v235 = vrot.slane %v230, %v234
    %237 = vrot.lane.b32.xlu0 %v224, 64
    %v238 = vpop.permute.xlu0 %237
    %239 = vrot.lane.b32.xlu0 %v235, 64
    %v240 = vpop.permute.xlu0 %239
    %v242 = vsel %vm53, %v238, 0
    %244 = vmatprep.subr.mxu0 0.0
    %245 = vmatpush1.msra.mxu0 0.0
    %246 = vmatprep.subr.mxu0 0.0
    %247 = vmatpush1.msra.mxu0 0.0
    %248 = vmatprep.subr.mxu0 0.0
    %249 = vmatpush1.msra.mxu0 0.0
    %250 = vmatprep.subr.mxu0 0.0
    %251 = vmatpush1.msra.mxu0 0.0
    %252 = vmatprep.subr.mxu0 0.0
    %253 = vmatpush1.msra.mxu0 0.0
    %254 = vmatprep.subr.mxu0 0.0
    %255 = vmatpush1.msra.mxu0 0.0
    %256 = vmatprep.subr.mxu0 0.0
    %257 = vmatpush1.msra.mxu0 0.0
    %258 = vmatprep.subr.mxu0 0.0
    %259 = vmatpush1.msra.mxu0 0.0
    %260 = vmatprep.subr.mxu0 0.0
    %261 = vmatpush1.msra.mxu0 0.0
    %262 = vmatprep.subr.mxu0 0.0
    %263 = vmatpush1.msra.mxu0 0.0
    %264 = vmatprep.subr.mxu0 0.0
    %265 = vmatpush1.msra.mxu0 0.0
    %266 = vmatprep.subr.mxu0 0.0
    %267 = vmatpush1.msra.mxu0 0.0
    %268 = vmatprep.subr.mxu0 0.0
    %269 = vmatpush1.msra.mxu0 %v229
    %270 = vmatprep.subr.mxu0 0.0
    %271 = vmatpush1.msra.mxu0 %v228
    %272 = vmatprep.subr.mxu0 0.0
    %273 = vmatpush1.msra.mxu0 %v227
    %274 = vmatprep.subr.mxu0 0.0
    %275 = vmatpush1.msra.mxu0 %v226
    %276 = vmatprep.subr.mxu0 0.0
    %277 = vmatpush2.msra.mxu0 0.0
    %278 = vmatprep.subr.mxu0 0.0
    %279 = vmatpush2.msra.mxu0 0.0
    %280 = vmatprep.subr.mxu0 0.0
    %281 = vmatpush2.msra.mxu0 0.0
    %282 = vmatprep.subr.mxu0 0.0
    %283 = vmatpush2.msra.mxu0 0.0
    %284 = vmatprep.subr.mxu0 0.0
    %285 = vmatpush2.msra.mxu0 0.0
    %286 = vmatprep.subr.mxu0 0.0
    %287 = vmatpush2.msra.mxu0 0.0
    %288 = vmatprep.subr.mxu0 0.0
    %289 = vmatpush2.msra.mxu0 0.0
    %290 = vmatprep.subr.mxu0 0.0
    %291 = vmatpush2.msra.mxu0 0.0
    %292 = vmatprep.subr.mxu0 0.0
    %293 = vmatpush2.msra.mxu0 0.0
    %294 = vmatprep.subr.mxu0 0.0
    %295 = vmatpush2.msra.mxu0 0.0
    %296 = vmatprep.subr.mxu0 0.0
    %297 = vmatpush2.msra.mxu0 0.0
    %298 = vmatprep.subr.mxu0 0.0
    %299 = vmatpush2.msra.mxu0 0.0
    %300 = vmatprep.subr.mxu0 0.0
    %301 = vmatpush2.msra.mxu0 0.0
    %302 = vmatprep.subr.mxu0 0.0
    %303 = vmatpush2.msra.mxu0 0.0
    %304 = vmatprep.subr.mxu0 0.0
    %305 = vmatpush2.msra.mxu0 0.0
    %306 = vmatprep.subr.mxu0 0.0
    %307 = vmatpush2.msra.mxu0 0.0
    %308 = vmatprep.mubr.f32.mxu0 0.0
    %309 = vmatmul.mubr.f32.gmra.mxu0 %v242
    %v310 = vpop.f32.mrf.mxu0
    %v311 = vadd.f32 %v240, %v310
    %v312 = vpop.f32.mrf.mxu0
    %313 = vdwg.mxu0
    %315 = vrot.lane.b32.xlu0 %v311, 64
    %v316 = vpop.permute.xlu0 %315
    %vm318 = vcmask 785920
    %319 = vst.msk [vmem:[#allocation7] sm:$0xff] %vm318, %v316
    %v320 = vld [vmem:[#allocation2] sm:$0xff]
    %s321 = scalar_lea.vmem [#allocation5], 96
    %v322 = vld [vmem:[%s321] sm:$0xff]
    %v323 = vld [vmem:[%s321 + $0x8] sm:$0xff]
    %v324 = vld [vmem:[%s321 + $0x10] sm:$0xff]
    %v325 = vld [vmem:[%s321 + $0x18] sm:$0xff]
    %v326 = vld [vmem:[%s2] sm:$0x1]
    %v328 = vlaneseq
    %v329 = vshrl.u32 %v328, 7
    %v330 = vsub.s32 0, %v329
    %v331 = vrot.slane %v326, %v330
    %333 = vrot.lane.b32.xlu0 %v320, 32
    %v334 = vpop.permute.xlu0 %333
    %335 = vrot.lane.b32.xlu0 %v331, 32
    %v336 = vpop.permute.xlu0 %335
    %v338 = vsel %vm53, %v334, 0
    %340 = vmatprep.subr.mxu0 0.0
    %341 = vmatpush1.msra.mxu0 0.0
    %342 = vmatprep.subr.mxu0 0.0
    %343 = vmatpush1.msra.mxu0 0.0
    %344 = vmatprep.subr.mxu0 0.0
    %345 = vmatpush1.msra.mxu0 0.0
    %346 = vmatprep.subr.mxu0 0.0
    %347 = vmatpush1.msra.mxu0 0.0
    %348 = vmatprep.subr.mxu0 0.0
    %349 = vmatpush1.msra.mxu0 0.0
    %350 = vmatprep.subr.mxu0 0.0
    %351 = vmatpush1.msra.mxu0 0.0
    %352 = vmatprep.subr.mxu0 0.0
    %353 = vmatpush1.msra.mxu0 0.0
    %354 = vmatprep.subr.mxu0 0.0
    %355 = vmatpush1.msra.mxu0 0.0
    %356 = vmatprep.subr.mxu0 0.0
    %357 = vmatpush1.msra.mxu0 0.0
    %358 = vmatprep.subr.mxu0 0.0
    %359 = vmatpush1.msra.mxu0 0.0
    %360 = vmatprep.subr.mxu0 0.0
    %361 = vmatpush1.msra.mxu0 0.0
    %362 = vmatprep.subr.mxu0 0.0
    %363 = vmatpush1.msra.mxu0 0.0
    %364 = vmatprep.subr.mxu0 0.0
    %365 = vmatpush1.msra.mxu0 %v325
    %366 = vmatprep.subr.mxu0 0.0
    %367 = vmatpush1.msra.mxu0 %v324
    %368 = vmatprep.subr.mxu0 0.0
    %369 = vmatpush1.msra.mxu0 %v323
    %370 = vmatprep.subr.mxu0 0.0
    %371 = vmatpush1.msra.mxu0 %v322
    %372 = vmatprep.subr.mxu0 0.0
    %373 = vmatpush2.msra.mxu0 0.0
    %374 = vmatprep.subr.mxu0 0.0
    %375 = vmatpush2.msra.mxu0 0.0
    %376 = vmatprep.subr.mxu0 0.0
    %377 = vmatpush2.msra.mxu0 0.0
    %378 = vmatprep.subr.mxu0 0.0
    %379 = vmatpush2.msra.mxu0 0.0
    %380 = vmatprep.subr.mxu0 0.0
    %381 = vmatpush2.msra.mxu0 0.0
    %382 = vmatprep.subr.mxu0 0.0
    %383 = vmatpush2.msra.mxu0 0.0
    %384 = vmatprep.subr.mxu0 0.0
    %385 = vmatpush2.msra.mxu0 0.0
    %386 = vmatprep.subr.mxu0 0.0
    %387 = vmatpush2.msra.mxu0 0.0
    %388 = vmatprep.subr.mxu0 0.0
    %389 = vmatpush2.msra.mxu0 0.0
    %390 = vmatprep.subr.mxu0 0.0
    %391 = vmatpush2.msra.mxu0 0.0
    %392 = vmatprep.subr.mxu0 0.0
    %393 = vmatpush2.msra.mxu0 0.0
    %394 = vmatprep.subr.mxu0 0.0
    %395 = vmatpush2.msra.mxu0 0.0
    %396 = vmatprep.subr.mxu0 0.0
    %397 = vmatpush2.msra.mxu0 0.0
    %398 = vmatprep.subr.mxu0 0.0
    %399 = vmatpush2.msra.mxu0 0.0
    %400 = vmatprep.subr.mxu0 0.0
    %401 = vmatpush2.msra.mxu0 0.0
    %402 = vmatprep.subr.mxu0 0.0
    %403 = vmatpush2.msra.mxu0 0.0
    %404 = vmatprep.mubr.f32.mxu0 0.0
    %405 = vmatmul.mubr.f32.gmra.mxu0 %v338
    %v406 = vpop.f32.mrf.mxu0
    %v407 = vadd.f32 %v336, %v406
    %v408 = vpop.f32.mrf.mxu0
    %409 = vdwg.mxu0
    %411 = vrot.lane.b32.xlu0 %v407, 96
    %v412 = vpop.permute.xlu0 %411
    %vm414 = vcmask 1048320
    %415 = vst.msk [vmem:[#allocation7] sm:$0xff] %vm414, %v412
    // Predicated region
    $region22: #{tpu_custom_call.1} parent=1 // pred_check
      _
    $region23: #{tpu_custom_call.1} parent=1 // pred_check_branch
      %417 = sbr.rel (0) target = $region25
    $region24: #{tpu_custom_call.1} parent=1 // pred_region
      %s419 = ssub.s32 128, 128
      %420 = vsyncadd [#allocation4], %s419
      %s422 = sshll.u32 [#allocation7], 4
      %s423 = int_to_ptr.vmem [resolvable:$true] %s422
      %425 = dma.vmem_to_hbm [thread:$0]  %s423, 128, %s3, [#allocation4]
    $region25: #{tpu_custom_call.1} parent=1 // pred_fallthru
      _
    // Predicated region
    $region26: #{tpu_custom_call.1} parent=1 // pred_check
      _
    $region27: #{tpu_custom_call.1} parent=1 // pred_check_branch
      %427 = sbr.rel (0) target = $region29
    $region28: #{tpu_custom_call.1} parent=1 // pred_region
      %428 = dma.done [#allocation4], 128
    $region29: #{tpu_custom_call.1} parent=1 // pred_fallthru
      _
    %429 = vsyncpa [#allocation3], 1
    %430 = vsyncpa [#allocation6], 1
    %431 = vsyncpa [#allocation4], 1

</llo_original>
